<compile_context>
chip_gen: v5e
topology: v5e:2x2
jax: 0.10.0
libtpu: 0.0.40
codegen_flags: <defaults>
</compile_context>

<pallas_src>
import numpy as np
import jax
import jax.numpy as jnp
from jax.experimental import pallas as pl
from jax.experimental.pallas import tpu as pltpu

# ---- model / problem sizes ----------------------------------------------------
HIDDEN_SIZE = 32                   # hidden_size
EMBED_SIZE = 16                    # embedding_size
D_IN = HIDDEN_SIZE + EMBED_SIZE    # 48  (Linear #1 input)
D1 = 600                           # Linear #1 output
D2 = 450                           # Linear #2 output
D_OUT = EMBED_SIZE                 # 16  (Linear #3 output)
B = 2                              # batch


def _round_up(n, m):
    return ((n + m - 1) // m) * m


# padded sizes used inside the kernel (only where it buys exact-zero lanes)
D1_P = _round_up(D1, 128)          # 640
D2_P = _round_up(D2, 128)          # 512
B_P = _round_up(B, 8)              # 8


def qnetwork_kernel(x_ref, w1_ref, b1_ref, w2_ref, b2_ref, w3_ref, b3_ref,
                    out_ref):
    # Layer 1: Linear + ReLU   (B_P, D_IN) @ (D_IN, D1_P), bf16 MXU, f32 acc
    h1 = jnp.maximum(
        jnp.dot(x_ref[...].astype(jnp.bfloat16), w1_ref[...],
                preferred_element_type=jnp.float32) + b1_ref[...], 0.0)
    # Layer 2: Linear + ReLU   (B_P, D1_P) @ (D1_P, D2_P)
    h2 = jnp.maximum(
        jnp.dot(h1.astype(jnp.bfloat16), w2_ref[...],
                preferred_element_type=jnp.float32) + b2_ref[...], 0.0)
    # Layer 3: Linear          (B_P, D2_P) @ (D2_P, D_OUT)
    out_ref[...] = (
        jnp.dot(h2.astype(jnp.bfloat16), w3_ref[...],
                preferred_element_type=jnp.float32) + b3_ref[...])


# ------------------------------ params ----------------------------------------
def init_params(key):
    """PyTorch nn.Linear default init: U(-1/sqrt(fan_in), 1/sqrt(fan_in))."""
    ks = jax.random.split(key, 6)

    def lin(kw, kb, fan_in, fan_out):
        bound = 1.0 / float(np.sqrt(fan_in))
        w = jax.random.uniform(kw, (fan_out, fan_in), jnp.float32, -bound, bound)
        b = jax.random.uniform(kb, (fan_out,), jnp.float32, -bound, bound)
        return w, b

    w1, b1 = lin(ks[0], ks[1], D_IN, D1)
    w2, b2 = lin(ks[2], ks[3], D1, D2)
    w3, b3 = lin(ks[4], ks[5], D2, D_OUT)
    return {'w1': w1, 'b1': b1, 'w2': w2, 'b2': b2, 'w3': w3, 'b3': b3}


def _pad2(a, rows, cols):
    return jnp.pad(a, ((0, rows - a.shape[0]), (0, cols - a.shape[1])))


def prepare_params(params):
    """One-time: transpose to (in, out), zero-pad the inner dims, cast weights
    to bf16. Done once at init so forward() never re-touches weight HBM layout."""
    return {
        'w1': _pad2(params['w1'].T, D_IN, D1_P).astype(jnp.bfloat16),   # (48, 640)
        'w2': _pad2(params['w2'].T, D1_P, D2_P).astype(jnp.bfloat16),   # (640, 512)
        'w3': _pad2(params['w3'].T, D2_P, D_OUT).astype(jnp.bfloat16),  # (512, 16)
        'b1': _pad2(params['b1'][None, :], 1, D1_P),                    # (1, 640) f32
        'b2': _pad2(params['b2'][None, :], 1, D2_P),                    # (1, 512) f32
        'b3': _pad2(params['b3'][None, :], 1, D_OUT),                   # (1, 16)  f32
    }


# ------------------------------ forward ----------------------------------------
_COST = pl.CostEstimate(
    flops=2 * (B_P * D_IN * D1_P + B_P * D1_P * D2_P + B_P * D2_P * D_OUT),
    transcendentals=0,
    bytes_accessed=2 * (D_IN * D1_P + D1_P * D2_P + D2_P * D_OUT)
                   + 4 * (D1_P + D2_P + D_OUT)
                   + 4 * (B_P * D_IN + B_P * D_OUT),
)


@jax.jit
def forward(prepped, x):
    b = x.shape[0]
    x_p = jnp.pad(x, ((0, B_P - b), (0, 0)))            # (8, 48) f32, tiny

    out_p = pl.pallas_call(
        qnetwork_kernel,
        out_shape=jax.ShapeDtypeStruct((B_P, D_OUT), jnp.float32),
        in_specs=[pl.BlockSpec(memory_space=pltpu.MemorySpace.VMEM)] * 7,
        out_specs=pl.BlockSpec(memory_space=pltpu.MemorySpace.VMEM),
        cost_estimate=_COST,
    )(x_p, prepped['w1'], prepped['b1'], prepped['w2'], prepped['b2'],
      prepped['w3'], prepped['b3'])
    return out_p[:b, :D_OUT]


# ------------------------------ pure-JAX reference ------------------------------
def reference_forward(params, x):
    h1 = jnp.maximum(x @ params['w1'].T + params['b1'], 0.0)
    h2 = jnp.maximum(h1 @ params['w2'].T + params['b2'], 0.0)
    return h2 @ params['w3'].T + params['b3']


if __name__ == "__main__":
    key = jax.random.PRNGKey(0)
    pkey, xkey = jax.random.split(key)
    params = init_params(pkey)
    prepped = prepare_params(params)
    x = jax.random.normal(xkey, (B, D_IN), jnp.float32)   # (batch, hidden+embed)

    out = forward(prepped, x)
    jax.block_until_ready(out)
    assert out.shape == (B, D_OUT)

    ref = reference_forward(params, x)                     # f32 reference
    # bf16 weights/activations on the MXU with f32 accumulation: small, bounded
    # quantization error vs the f32 reference.
    np.testing.assert_allclose(np.asarray(out), np.asarray(ref),
                               rtol=5e-3, atol=5e-3)
    print("KERNEL_OK")
</pallas_src>

<mosaic_0001>
module attributes {stable_mosaic.version = 11 : i64} {
  func.func @qnetwork_kernel(%arg0: memref<8x48xf32, #tpu.memory_space<vmem>>, %arg1: memref<48x640xbf16, #tpu.memory_space<vmem>>, %arg2: memref<1x640xf32, #tpu.memory_space<vmem>>, %arg3: memref<640x512xbf16, #tpu.memory_space<vmem>>, %arg4: memref<1x512xf32, #tpu.memory_space<vmem>>, %arg5: memref<512x16xbf16, #tpu.memory_space<vmem>>, %arg6: memref<1x16xf32, #tpu.memory_space<vmem>>, %arg7: memref<8x16xf32, #tpu.memory_space<vmem>>) attributes {dimension_semantics = [], scalar_prefetch = 0 : i64, scratch_operands = 0 : i64, tpu.core_type = #tpu.core_type<tc>} {
    %c0 = arith.constant 0 : index
    %c0_0 = arith.constant 0 : index
    %0 = vector.load %arg0[%c0, %c0_0] : memref<8x48xf32, #tpu.memory_space<vmem>>, vector<8x48xf32>
    %1 = arith.truncf %0 : vector<8x48xf32> to vector<8x48xbf16>
    %c0_1 = arith.constant 0 : index
    %c0_2 = arith.constant 0 : index
    %2 = vector.load %arg1[%c0_1, %c0_2] : memref<48x640xbf16, #tpu.memory_space<vmem>>, vector<48x640xbf16>
    %cst = arith.constant dense<0.000000e+00> : vector<8x640xf32>
    %3 = tpu.matmul %1, %2, %cst {dimension_numbers = #tpu.dot_dimension_numbers<[1], [0], [0], [1], [0, 0, 1, 1], [], []>} : vector<8x48xbf16>, vector<48x640xbf16>, vector<8x640xf32> -> vector<8x640xf32>
    %c0_3 = arith.constant 0 : index
    %c0_4 = arith.constant 0 : index
    %4 = vector.load %arg2[%c0_3, %c0_4] : memref<1x640xf32, #tpu.memory_space<vmem>>, vector<1x640xf32>
    %5 = vector.broadcast %4 : vector<1x640xf32> to vector<8x640xf32>
    %6 = arith.addf %3, %5 : vector<8x640xf32>
    %cst_5 = arith.constant 0.000000e+00 : f32
    %7 = vector.broadcast %cst_5 : f32 to vector<8x640xf32>
    %8 = arith.maximumf %6, %7 : vector<8x640xf32>
    %9 = arith.truncf %8 : vector<8x640xf32> to vector<8x640xbf16>
    %c0_6 = arith.constant 0 : index
    %c0_7 = arith.constant 0 : index
    %10 = vector.load %arg3[%c0_6, %c0_7] : memref<640x512xbf16, #tpu.memory_space<vmem>>, vector<640x512xbf16>
    %cst_8 = arith.constant dense<0.000000e+00> : vector<8x512xf32>
    %11 = tpu.matmul %9, %10, %cst_8 {dimension_numbers = #tpu.dot_dimension_numbers<[1], [0], [0], [1], [0, 0, 1, 1], [], []>} : vector<8x640xbf16>, vector<640x512xbf16>, vector<8x512xf32> -> vector<8x512xf32>
    %c0_9 = arith.constant 0 : index
    %c0_10 = arith.constant 0 : index
    %12 = vector.load %arg4[%c0_9, %c0_10] : memref<1x512xf32, #tpu.memory_space<vmem>>, vector<1x512xf32>
    %13 = vector.broadcast %12 : vector<1x512xf32> to vector<8x512xf32>
    %14 = arith.addf %11, %13 : vector<8x512xf32>
    %cst_11 = arith.constant 0.000000e+00 : f32
    %15 = vector.broadcast %cst_11 : f32 to vector<8x512xf32>
    %16 = arith.maximumf %14, %15 : vector<8x512xf32>
    %17 = arith.truncf %16 : vector<8x512xf32> to vector<8x512xbf16>
    %c0_12 = arith.constant 0 : index
    %c0_13 = arith.constant 0 : index
    %18 = vector.load %arg5[%c0_12, %c0_13] : memref<512x16xbf16, #tpu.memory_space<vmem>>, vector<512x16xbf16>
    %cst_14 = arith.constant dense<0.000000e+00> : vector<8x16xf32>
    %19 = tpu.matmul %17, %18, %cst_14 {dimension_numbers = #tpu.dot_dimension_numbers<[1], [0], [0], [1], [0, 0, 1, 1], [], []>} : vector<8x512xbf16>, vector<512x16xbf16>, vector<8x16xf32> -> vector<8x16xf32>
    %c0_15 = arith.constant 0 : index
    %c0_16 = arith.constant 0 : index
    %20 = vector.load %arg6[%c0_15, %c0_16] : memref<1x16xf32, #tpu.memory_space<vmem>>, vector<1x16xf32>
    %21 = vector.broadcast %20 : vector<1x16xf32> to vector<8x16xf32>
    %22 = arith.addf %19, %21 : vector<8x16xf32>
    %c0_17 = arith.constant 0 : index
    %c0_18 = arith.constant 0 : index
    %23 = vector.load %arg7[%c0_17, %c0_18] : memref<8x16xf32, #tpu.memory_space<vmem>>, vector<8x16xf32>
    tpu.vector_store %arg7[%c0_17, %c0_18], %22 {strides = array<i32>} : memref<8x16xf32, #tpu.memory_space<vmem>>, vector<8x16xf32>,
    return
  }
}

</mosaic_0001>

<llo_original>
// kernel: forward.1
$region0: #{forward.1}
  #allocation0 [shape = 'u32[]', space=smem, size = 0x4, offset = 0x4, fixed_abs, tag = 'smem constant byte address 0x4 - core index']
  #allocation1 [shape = 'u32[72,128]{1,0:T(1,128)}', space=vmem, size = 0x9000, scoped, tag = 'internal scratch']
  %s0 = inlined_call_operand.vmem [shape: f32[8,48], index: 0, kind: input, shape index: {}]
  %s1 = inlined_call_operand.vmem [shape: bf16[48,640], index: 1, kind: input, shape index: {}]
  %s2 = inlined_call_operand.vmem [shape: f32[1,640], index: 2, kind: input, shape index: {}]
  %s3 = inlined_call_operand.hbm [shape: bf16[640,512], index: 3, kind: input, shape index: {}]
  %s4 = inlined_call_operand.vmem [shape: f32[1,512], index: 4, kind: input, shape index: {}]
  %s5 = inlined_call_operand.vmem [shape: bf16[512,16], index: 5, kind: input, shape index: {}]
  %s6 = inlined_call_operand.vmem [shape: f32[1,16], index: 6, kind: input, shape index: {}]
  %s7 = inlined_call_operand.vmem [shape: f32[8,16], index: 7, kind: output, shape index: {}]
  %s8 = sld [smem:[#allocation0]]
  $region42: #{forward.1} parent=0
    _
  %s10 = ssub.s32 1, %s8
  %s11 = scalar_select 0, %s10, %s8
  $region1: #{forward.1} parent=0
    #allocation2 [shape = 'u8[655360]{0}', space=vmem, size = 0xa0000, scoped, tag = 'input window, operand 3, single buffered']
    #allocation3 [shape = 's32[1]{0}', space=sflag, size = 0x4, scoped, tag = 'scoped memory for forward.1']
    %12 = vsyncpa [#allocation3], 0
    // Predicated region
    $region2: #{forward.1} parent=1 // pred_check
      _
    $region3: #{forward.1} parent=1 // pred_check_branch
      %14 = sbr.rel (0) target = $region5
    $region4: #{forward.1} parent=1 // pred_region
      _
    $region5: #{forward.1} parent=1 // pred_fallthru
      _
    // Predicated region
    $region6: #{forward.1} parent=1 // pred_check
      _
    $region7: #{forward.1} parent=1 // pred_check_branch
      %16 = sbr.rel (0) target = $region9
    $region8: #{forward.1} parent=1 // pred_region
      _
    $region9: #{forward.1} parent=1 // pred_fallthru
      _
    // Predicated region
    $region10: #{forward.1} parent=1 // pred_check
      _
    $region11: #{forward.1} parent=1 // pred_check_branch
      %18 = sbr.rel (0) target = $region13
    $region12: #{forward.1} parent=1 // pred_region
      _
    $region13: #{forward.1} parent=1 // pred_fallthru
      _
    // Predicated region
    $region14: #{forward.1} parent=1 // pred_check
      _
    $region15: #{forward.1} parent=1 // pred_check_branch
      %20 = sbr.rel (0) target = $region17
    $region16: #{forward.1} parent=1 // pred_region
      %22 = vsyncadd [#allocation3], 0
      %s23 = sshll.u32 %s3, 4
      %s24 = int_to_ptr.hbm [resolvable:$true] %s23
      %s25 = sshll.u32 [#allocation2], 4
      %s26 = int_to_ptr.vmem [resolvable:$true] %s25
      %31 = dma.hbm_to_vmem [thread:$0]  %s24, 20480, %s26, [#allocation3], 256, 256, 16
    $region17: #{forward.1} parent=1 // pred_fallthru
      _
    // Predicated region
    $region18: #{forward.1} parent=1 // pred_check
      _
    $region19: #{forward.1} parent=1 // pred_check_branch
      %33 = sbr.rel (0) target = $region21
    $region20: #{forward.1} parent=1 // pred_region
      _
    $region21: #{forward.1} parent=1 // pred_fallthru
      _
    // Predicated region
    $region22: #{forward.1} parent=1 // pred_check
      _
    $region23: #{forward.1} parent=1 // pred_check_branch
      %35 = sbr.rel (0) target = $region25
    $region24: #{forward.1} parent=1 // pred_region
      _
    $region25: #{forward.1} parent=1 // pred_fallthru
      _
    // Predicated region
    $region26: #{forward.1} parent=1 // pred_check
      _
    $region27: #{forward.1} parent=1 // pred_check_branch
      %37 = sbr.rel (0) target = $region29
    $region28: #{forward.1} parent=1 // pred_region
      _
    $region29: #{forward.1} parent=1 // pred_fallthru
      _
    // Predicated region
    $region30: #{forward.1} parent=1 // pred_check
      _
    $region31: #{forward.1} parent=1 // pred_check_branch
      %39 = sbr.rel (0) target = $region33
    $region32: #{forward.1} parent=1 // pred_region
      %41 = dma.done [#allocation3], 20480
    $region33: #{forward.1} parent=1 // pred_fallthru
      _
    %v43 = vld [vmem:[%s0] sm:$0xff]
    %v44 = vpack.c.bf16 %v43, %v43
    %v45 = vld [vmem:[%s1] sm:$0xff]
    %v46 = vld [vmem:[%s1 + $0x8] sm:$0xff]
    %v47 = vld [vmem:[%s1 + $0x10] sm:$0xf]
    %v48 = vld [vmem:[%s1 + $0x14] sm:$0xff]
    %v49 = vld [vmem:[%s1 + $0x1c] sm:$0xff]
    %v50 = vld [vmem:[%s1 + $0x24] sm:$0xf]
    %v51 = vld [vmem:[%s1 + $0x28] sm:$0xff]
    %v52 = vld [vmem:[%s1 + $0x30] sm:$0xff]
    %v53 = vld [vmem:[%s1 + $0x38] sm:$0xf]
    %v54 = vld [vmem:[%s1 + $0x3c] sm:$0xff]
    %v55 = vld [vmem:[%s1 + $0x44] sm:$0xff]
    %v56 = vld [vmem:[%s1 + $0x4c] sm:$0xf]
    %v57 = vld [vmem:[%s1 + $0x50] sm:$0xff]
    %v58 = vld [vmem:[%s1 + $0x58] sm:$0xff]
    %v59 = vld [vmem:[%s1 + $0x60] sm:$0xf]
    %v60 = vld [vmem:[%s1 + $0x64] sm:$0xff]
    %v61 = vld [vmem:[%s1 + $0x6c] sm:$0xff]
    %v62 = vld [vmem:[%s1 + $0x74] sm:$0xf]
    %v63 = vld [vmem:[%s2] sm:$0x1f]
    %v65 = vperm.slane %v63, 0
    %v66 = vperm.slane %v63, 1
    %v67 = vperm.slane %v63, 2
    %v68 = vperm.slane %v63, 3
    %v69 = vperm.slane %v63, 4
    %v93 = vunpack.c.l.b16 %v45
    %v94 = vunpack.c.h.b16 %v45
    %v95 = vunpack.c.l.b16 %v46
    %v96 = vunpack.c.h.b16 %v46
    %v97 = vunpack.c.l.b16 %v47
    %v98 = vunpack.c.l.b16 %v48
    %v99 = vunpack.c.h.b16 %v48
    %v100 = vunpack.c.l.b16 %v49
    %v101 = vunpack.c.h.b16 %v49
    %v102 = vunpack.c.l.b16 %v50
    %v103 = vunpack.c.l.b16 %v51
    %v104 = vunpack.c.h.b16 %v51
    %v105 = vunpack.c.l.b16 %v52
    %v106 = vunpack.c.h.b16 %v52
    %v107 = vunpack.c.l.b16 %v53
    %v108 = vunpack.c.l.b16 %v54
    %v109 = vunpack.c.h.b16 %v54
    %v110 = vunpack.c.l.b16 %v55
    %v111 = vunpack.c.h.b16 %v55
    %v112 = vunpack.c.l.b16 %v56
    %v113 = vunpack.c.l.b16 %v57
    %v114 = vunpack.c.h.b16 %v57
    %v115 = vunpack.c.l.b16 %v58
    %v116 = vunpack.c.h.b16 %v58
    %v117 = vunpack.c.l.b16 %v59
    %v118 = vunpack.c.l.b16 %v60
    %v119 = vunpack.c.h.b16 %v60
    %v120 = vunpack.c.l.b16 %v61
    %v121 = vunpack.c.h.b16 %v61
    %v122 = vunpack.c.l.b16 %v62
    %v123 = vpack.c.b16 %v98, %v93
    %v124 = vpack.c.b16 %v99, %v94
    %v125 = vpack.c.b16 %v100, %v95
    %v126 = vpack.c.b16 %v101, %v96
    %v127 = vpack.c.b16 %v102, %v97
    %v128 = vpack.c.b16 %v108, %v103
    %v129 = vpack.c.b16 %v109, %v104
    %v130 = vpack.c.b16 %v110, %v105
    %v131 = vpack.c.b16 %v111, %v106
    %v132 = vpack.c.b16 %v112, %v107
    %v133 = vpack.c.b16 %v118, %v113
    %v134 = vpack.c.b16 %v119, %v114
    %v135 = vpack.c.b16 %v120, %v115
    %v136 = vpack.c.b16 %v121, %v116
    %v137 = vpack.c.b16 %v122, %v117
    %vm153 = vcmask 392192
    %v155 = vsel %vm153, %v44, 0
    %157 = vmatpush.bf16.msra.mxu0 0
    %158 = vmatpush.bf16.msra.mxu0 0
    %159 = vmatpush.bf16.msra.mxu0 0
    %160 = vmatpush.bf16.msra.mxu0 0
    %161 = vmatpush.bf16.msra.mxu0 0
    %162 = vmatpush.bf16.msra.mxu0 %v133
    %163 = vmatpush.bf16.msra.mxu0 %v128
    %164 = vmatpush.bf16.msra.mxu0 %v123
    %165 = vmatmul.bf16.gmra.mxu0 %v155
    %v166 = vpop.f32.mrf.mxu0
    %v167 = vadd.f32 %v65, %v166
    %v168 = vpop.f32.mrf.mxu0
    %169 = vdwg.mxu0
    %170 = vmatpush.bf16.msra.mxu0 0
    %171 = vmatpush.bf16.msra.mxu0 0
    %172 = vmatpush.bf16.msra.mxu0 0
    %173 = vmatpush.bf16.msra.mxu0 0
    %174 = vmatpush.bf16.msra.mxu0 0
    %175 = vmatpush.bf16.msra.mxu0 %v134
    %176 = vmatpush.bf16.msra.mxu0 %v129
    %177 = vmatpush.bf16.msra.mxu0 %v124
    %178 = vmatmul.bf16.gmra.mxu0 %v155
    %v179 = vpop.f32.mrf.mxu0
    %v180 = vadd.f32 %v66, %v179
    %v181 = vpop.f32.mrf.mxu0
    %182 = vdwg.mxu0
    %183 = vmatpush.bf16.msra.mxu0 0
    %184 = vmatpush.bf16.msra.mxu0 0
    %185 = vmatpush.bf16.msra.mxu0 0
    %186 = vmatpush.bf16.msra.mxu0 0
    %187 = vmatpush.bf16.msra.mxu0 0
    %188 = vmatpush.bf16.msra.mxu0 %v135
    %189 = vmatpush.bf16.msra.mxu0 %v130
    %190 = vmatpush.bf16.msra.mxu0 %v125
    %191 = vmatmul.bf16.gmra.mxu0 %v155
    %v192 = vpop.f32.mrf.mxu0
    %v193 = vadd.f32 %v67, %v192
    %v194 = vpop.f32.mrf.mxu0
    %195 = vdwg.mxu0
    %196 = vmatpush.bf16.msra.mxu0 0
    %197 = vmatpush.bf16.msra.mxu0 0
    %198 = vmatpush.bf16.msra.mxu0 0
    %199 = vmatpush.bf16.msra.mxu0 0
    %200 = vmatpush.bf16.msra.mxu0 0
    %201 = vmatpush.bf16.msra.mxu0 %v136
    %202 = vmatpush.bf16.msra.mxu0 %v131
    %203 = vmatpush.bf16.msra.mxu0 %v126
    %204 = vmatmul.bf16.gmra.mxu0 %v155
    %v205 = vpop.f32.mrf.mxu0
    %v206 = vadd.f32 %v68, %v205
    %v207 = vpop.f32.mrf.mxu0
    %208 = vdwg.mxu0
    %209 = vmatpush.bf16.msra.mxu0 0
    %210 = vmatpush.bf16.msra.mxu0 0
    %211 = vmatpush.bf16.msra.mxu0 0
    %212 = vmatpush.bf16.msra.mxu0 0
    %213 = vmatpush.bf16.msra.mxu0 0
    %214 = vmatpush.bf16.msra.mxu0 %v137
    %215 = vmatpush.bf16.msra.mxu0 %v132
    %216 = vmatpush.bf16.msra.mxu0 %v127
    %217 = vmatmul.bf16.gmra.mxu0 %v155
    %v218 = vpop.f32.mrf.mxu0
    %v219 = vadd.f32 %v69, %v218
    %v220 = vpop.f32.mrf.mxu0
    %221 = vdwg.mxu0
    %v222 = vmax.f32 %v167, 0.0
    %v223 = vmax.f32 %v180, 0.0
    %v224 = vmax.f32 %v193, 0.0
    %v225 = vmax.f32 %v206, 0.0
    %v226 = vmax.f32 %v219, 0.0
    %v227 = vpack.c.bf16 %v222, %v222
    %v228 = vpack.c.bf16 %v223, %v223
    %v229 = vpack.c.bf16 %v224, %v224
    %v230 = vpack.c.bf16 %v225, %v225
    %v231 = vpack.c.bf16 %v226, %v226
    %v232 = vld [vmem:[#allocation2] sm:$0xff]
    %v233 = vld [vmem:[#allocation2 + $0x8] sm:$0xff]
    %v234 = vld [vmem:[#allocation2 + $0x10] sm:$0xff]
    %v235 = vld [vmem:[#allocation2 + $0x18] sm:$0xff]
    %v236 = vld [vmem:[#allocation2 + $0x20] sm:$0xff]
    %v237 = vld [vmem:[#allocation2 + $0x28] sm:$0xff]
    %v238 = vld [vmem:[#allocation2 + $0x30] sm:$0xff]
    %v239 = vld [vmem:[#allocation2 + $0x38] sm:$0xff]
    %v240 = vld [vmem:[#allocation2 + $0x40] sm:$0xff]
    %v241 = vld [vmem:[#allocation2 + $0x48] sm:$0xff]
    %v242 = vld [vmem:[#allocation2 + $0x50] sm:$0xff]
    %v243 = vld [vmem:[#allocation2 + $0x58] sm:$0xff]
    %v244 = vld [vmem:[#allocation2 + $0x60] sm:$0xff]
    %v245 = vld [vmem:[#allocation2 + $0x68] sm:$0xff]
    %v246 = vld [vmem:[#allocation2 + $0x70] sm:$0xff]
    %v247 = vld [vmem:[#allocation2 + $0x78] sm:$0xff]
    %v248 = vld [vmem:[#allocation2 + $0x80] sm:$0xff]
    %v249 = vld [vmem:[#allocation2 + $0x88] sm:$0xff]
    %v250 = vld [vmem:[#allocation2 + $0x90] sm:$0xff]
    %v251 = vld [vmem:[#allocation2 + $0x98] sm:$0xff]
    %v252 = vld [vmem:[#allocation2 + $0xa0] sm:$0xff]
    %v253 = vld [vmem:[#allocation2 + $0xa8] sm:$0xff]
    %v254 = vld [vmem:[#allocation2 + $0xb0] sm:$0xff]
    %v255 = vld [vmem:[#allocation2 + $0xb8] sm:$0xff]
    %v256 = vld [vmem:[#allocation2 + $0xc0] sm:$0xff]
    %v257 = vld [vmem:[#allocation2 + $0xc8] sm:$0xff]
    %v258 = vld [vmem:[#allocation2 + $0xd0] sm:$0xff]
    %v259 = vld [vmem:[#allocation2 + $0xd8] sm:$0xff]
    %v260 = vld [vmem:[#allocation2 + $0xe0] sm:$0xff]
    %v261 = vld [vmem:[#allocation2 + $0xe8] sm:$0xff]
    %v262 = vld [vmem:[#allocation2 + $0xf0] sm:$0xff]
    %v263 = vld [vmem:[#allocation2 + $0xf8] sm:$0xff]
    %v264 = vld [vmem:[#allocation2 + $0x100] sm:$0xff]
    %v265 = vld [vmem:[#allocation2 + $0x108] sm:$0xff]
    %v266 = vld [vmem:[#allocation2 + $0x110] sm:$0xff]
    %v267 = vld [vmem:[#allocation2 + $0x118] sm:$0xff]
    %v268 = vld [vmem:[#allocation2 + $0x120] sm:$0xff]
    %v269 = vld [vmem:[#allocation2 + $0x128] sm:$0xff]
    %v270 = vld [vmem:[#allocation2 + $0x130] sm:$0xff]
    %v271 = vld [vmem:[#allocation2 + $0x138] sm:$0xff]
    %v272 = vld [vmem:[#allocation2 + $0x140] sm:$0xff]
    %v273 = vld [vmem:[#allocation2 + $0x148] sm:$0xff]
    %v274 = vld [vmem:[#allocation2 + $0x150] sm:$0xff]
    %v275 = vld [vmem:[#allocation2 + $0x158] sm:$0xff]
    %v276 = vld [vmem:[#allocation2 + $0x160] sm:$0xff]
    %v277 = vld [vmem:[#allocation2 + $0x168] sm:$0xff]
    %v278 = vld [vmem:[#allocation2 + $0x170] sm:$0xff]
    %v279 = vld [vmem:[#allocation2 + $0x178] sm:$0xff]
    %v280 = vld [vmem:[#allocation2 + $0x180] sm:$0xff]
    %v281 = vld [vmem:[#allocation2 + $0x188] sm:$0xff]
    %v282 = vld [vmem:[#allocation2 + $0x190] sm:$0xff]
    %v283 = vld [vmem:[#allocation2 + $0x198] sm:$0xff]
    %v284 = vld [vmem:[#allocation2 + $0x1a0] sm:$0xff]
    %v285 = vld [vmem:[#allocation2 + $0x1a8] sm:$0xff]
    %v286 = vld [vmem:[#allocation2 + $0x1b0] sm:$0xff]
    %v287 = vld [vmem:[#allocation2 + $0x1b8] sm:$0xff]
    %v288 = vld [vmem:[#allocation2 + $0x1c0] sm:$0xff]
    %v289 = vld [vmem:[#allocation2 + $0x1c8] sm:$0xff]
    %v290 = vld [vmem:[#allocation2 + $0x1d0] sm:$0xff]
    %v291 = vld [vmem:[#allocation2 + $0x1d8] sm:$0xff]
    %v292 = vld [vmem:[#allocation2 + $0x1e0] sm:$0xff]
    %v293 = vld [vmem:[#allocation2 + $0x1e8] sm:$0xff]
    %v294 = vld [vmem:[#allocation2 + $0x1f0] sm:$0xff]
    %v295 = vld [vmem:[#allocation2 + $0x1f8] sm:$0xff]
    %v296 = vld [vmem:[#allocation2 + $0x200] sm:$0xff]
    %v297 = vld [vmem:[#allocation2 + $0x208] sm:$0xff]
    %v298 = vld [vmem:[#allocation2 + $0x210] sm:$0xff]
    %v299 = vld [vmem:[#allocation2 + $0x218] sm:$0xff]
    %v300 = vld [vmem:[#allocation2 + $0x220] sm:$0xff]
    %v301 = vld [vmem:[#allocation2 + $0x228] sm:$0xff]
    %v302 = vld [vmem:[#allocation2 + $0x230] sm:$0xff]
    %v303 = vld [vmem:[#allocation2 + $0x238] sm:$0xff]
    %v304 = vld [vmem:[#allocation2 + $0x240] sm:$0xff]
    %v305 = vld [vmem:[#allocation2 + $0x248] sm:$0xff]
    %v306 = vld [vmem:[#allocation2 + $0x250] sm:$0xff]
    %v307 = vld [vmem:[#allocation2 + $0x258] sm:$0xff]
    %v308 = vld [vmem:[#allocation2 + $0x260] sm:$0xff]
    %v309 = vld [vmem:[#allocation2 + $0x268] sm:$0xff]
    %v310 = vld [vmem:[#allocation2 + $0x270] sm:$0xff]
    %v311 = vld [vmem:[#allocation2 + $0x278] sm:$0xff]
    %v312 = vld [vmem:[#allocation2 + $0x280] sm:$0xff]
    %v313 = vld [vmem:[#allocation2 + $0x288] sm:$0xff]
    %v314 = vld [vmem:[#allocation2 + $0x290] sm:$0xff]
    %v315 = vld [vmem:[#allocation2 + $0x298] sm:$0xff]
    %v316 = vld [vmem:[#allocation2 + $0x2a0] sm:$0xff]
    %v317 = vld [vmem:[#allocation2 + $0x2a8] sm:$0xff]
    %v318 = vld [vmem:[#allocation2 + $0x2b0] sm:$0xff]
    %v319 = vld [vmem:[#allocation2 + $0x2b8] sm:$0xff]
    %v320 = vld [vmem:[#allocation2 + $0x2c0] sm:$0xff]
    %v321 = vld [vmem:[#allocation2 + $0x2c8] sm:$0xff]
    %v322 = vld [vmem:[#allocation2 + $0x2d0] sm:$0xff]
    %v323 = vld [vmem:[#allocation2 + $0x2d8] sm:$0xff]
    %v324 = vld [vmem:[#allocation2 + $0x2e0] sm:$0xff]
    %v325 = vld [vmem:[#allocation2 + $0x2e8] sm:$0xff]
    %v326 = vld [vmem:[#allocation2 + $0x2f0] sm:$0xff]
    %v327 = vld [vmem:[#allocation2 + $0x2f8] sm:$0xff]
    %v328 = vld [vmem:[#allocation2 + $0x300] sm:$0xff]
    %v329 = vld [vmem:[#allocation2 + $0x308] sm:$0xff]
    %v330 = vld [vmem:[#allocation2 + $0x310] sm:$0xff]
    %v331 = vld [vmem:[#allocation2 + $0x318] sm:$0xff]
    %v332 = vld [vmem:[#allocation2 + $0x320] sm:$0xff]
    %v333 = vld [vmem:[#allocation2 + $0x328] sm:$0xff]
    %v334 = vld [vmem:[#allocation2 + $0x330] sm:$0xff]
    %v335 = vld [vmem:[#allocation2 + $0x338] sm:$0xff]
    %v336 = vld [vmem:[#allocation2 + $0x340] sm:$0xff]
    %v337 = vld [vmem:[#allocation2 + $0x348] sm:$0xff]
    %v338 = vld [vmem:[#allocation2 + $0x350] sm:$0xff]
    %v339 = vld [vmem:[#allocation2 + $0x358] sm:$0xff]
    %v340 = vld [vmem:[#allocation2 + $0x360] sm:$0xff]
    %v341 = vld [vmem:[#allocation2 + $0x368] sm:$0xff]
    %v342 = vld [vmem:[#allocation2 + $0x370] sm:$0xff]
    %v343 = vld [vmem:[#allocation2 + $0x378] sm:$0xff]
    %v344 = vld [vmem:[#allocation2 + $0x380] sm:$0xff]
    %v345 = vld [vmem:[#allocation2 + $0x388] sm:$0xff]
    %v346 = vld [vmem:[#allocation2 + $0x390] sm:$0xff]
    %v347 = vld [vmem:[#allocation2 + $0x398] sm:$0xff]
    %v348 = vld [vmem:[#allocation2 + $0x3a0] sm:$0xff]
    %v349 = vld [vmem:[#allocation2 + $0x3a8] sm:$0xff]
    %v350 = vld [vmem:[#allocation2 + $0x3b0] sm:$0xff]
    %v351 = vld [vmem:[#allocation2 + $0x3b8] sm:$0xff]
    %v352 = vld [vmem:[#allocation2 + $0x3c0] sm:$0xff]
    %v353 = vld [vmem:[#allocation2 + $0x3c8] sm:$0xff]
    %v354 = vld [vmem:[#allocation2 + $0x3d0] sm:$0xff]
    %v355 = vld [vmem:[#allocation2 + $0x3d8] sm:$0xff]
    %v356 = vld [vmem:[#allocation2 + $0x3e0] sm:$0xff]
    %v357 = vld [vmem:[#allocation2 + $0x3e8] sm:$0xff]
    %v358 = vld [vmem:[#allocation2 + $0x3f0] sm:$0xff]
    %v359 = vld [vmem:[#allocation2 + $0x3f8] sm:$0xff]
    %v360 = vld [vmem:[#allocation2 + $0x400] sm:$0xff]
    %v361 = vld [vmem:[#allocation2 + $0x408] sm:$0xff]
    %v362 = vld [vmem:[#allocation2 + $0x410] sm:$0xff]
    %v363 = vld [vmem:[#allocation2 + $0x418] sm:$0xff]
    %v364 = vld [vmem:[#allocation2 + $0x420] sm:$0xff]
    %v365 = vld [vmem:[#allocation2 + $0x428] sm:$0xff]
    %v366 = vld [vmem:[#allocation2 + $0x430] sm:$0xff]
    %v367 = vld [vmem:[#allocation2 + $0x438] sm:$0xff]
    %v368 = vld [vmem:[#allocation2 + $0x440] sm:$0xff]
    %v369 = vld [vmem:[#allocation2 + $0x448] sm:$0xff]
    %v370 = vld [vmem:[#allocation2 + $0x450] sm:$0xff]
    %v371 = vld [vmem:[#allocation2 + $0x458] sm:$0xff]
    %v372 = vld [vmem:[#allocation2 + $0x460] sm:$0xff]
    %v373 = vld [vmem:[#allocation2 + $0x468] sm:$0xff]
    %v374 = vld [vmem:[#allocation2 + $0x470] sm:$0xff]
    %v375 = vld [vmem:[#allocation2 + $0x478] sm:$0xff]
    %v376 = vld [vmem:[#allocation2 + $0x480] sm:$0xff]
    %v377 = vld [vmem:[#allocation2 + $0x488] sm:$0xff]
    %v378 = vld [vmem:[#allocation2 + $0x490] sm:$0xff]
    %v379 = vld [vmem:[#allocation2 + $0x498] sm:$0xff]
    %v380 = vld [vmem:[#allocation2 + $0x4a0] sm:$0xff]
    %v381 = vld [vmem:[#allocation2 + $0x4a8] sm:$0xff]
    %v382 = vld [vmem:[#allocation2 + $0x4b0] sm:$0xff]
    %v383 = vld [vmem:[#allocation2 + $0x4b8] sm:$0xff]
    %v384 = vld [vmem:[#allocation2 + $0x4c0] sm:$0xff]
    %v385 = vld [vmem:[#allocation2 + $0x4c8] sm:$0xff]
    %v386 = vld [vmem:[#allocation2 + $0x4d0] sm:$0xff]
    %v387 = vld [vmem:[#allocation2 + $0x4d8] sm:$0xff]
    %v388 = vld [vmem:[#allocation2 + $0x4e0] sm:$0xff]
    %v389 = vld [vmem:[#allocation2 + $0x4e8] sm:$0xff]
    %v390 = vld [vmem:[#allocation2 + $0x4f0] sm:$0xff]
    %v391 = vld [vmem:[#allocation2 + $0x4f8] sm:$0xff]
    %v392 = vld [vmem:[%s4] sm:$0xf]
    %v394 = vperm.slane %v392, 0
    %v395 = vperm.slane %v392, 1
    %v396 = vperm.slane %v392, 2
    %v397 = vperm.slane %v392, 3
    %v562 = vunpack.c.l.b16 %v232
    %v563 = vunpack.c.h.b16 %v232
    %v564 = vunpack.c.l.b16 %v233
    %v565 = vunpack.c.h.b16 %v233
    %v566 = vunpack.c.l.b16 %v234
    %v567 = vunpack.c.h.b16 %v234
    %v568 = vunpack.c.l.b16 %v235
    %v569 = vunpack.c.h.b16 %v235
    %v570 = vunpack.c.l.b16 %v236
    %v571 = vunpack.c.h.b16 %v236
    %v572 = vunpack.c.l.b16 %v237
    %v573 = vunpack.c.h.b16 %v237
    %v574 = vunpack.c.l.b16 %v238
    %v575 = vunpack.c.h.b16 %v238
    %v576 = vunpack.c.l.b16 %v239
    %v577 = vunpack.c.h.b16 %v239
    %v578 = vunpack.c.l.b16 %v240
    %v579 = vunpack.c.h.b16 %v240
    %v580 = vunpack.c.l.b16 %v241
    %v581 = vunpack.c.h.b16 %v241
    %v582 = vunpack.c.l.b16 %v242
    %v583 = vunpack.c.h.b16 %v242
    %v584 = vunpack.c.l.b16 %v243
    %v585 = vunpack.c.h.b16 %v243
    %v586 = vunpack.c.l.b16 %v244
    %v587 = vunpack.c.h.b16 %v244
    %v588 = vunpack.c.l.b16 %v245
    %v589 = vunpack.c.h.b16 %v245
    %v590 = vunpack.c.l.b16 %v246
    %v591 = vunpack.c.h.b16 %v246
    %v592 = vunpack.c.l.b16 %v247
    %v593 = vunpack.c.h.b16 %v247
    %v594 = vunpack.c.l.b16 %v248
    %v595 = vunpack.c.h.b16 %v248
    %v596 = vunpack.c.l.b16 %v249
    %v597 = vunpack.c.h.b16 %v249
    %v598 = vunpack.c.l.b16 %v250
    %v599 = vunpack.c.h.b16 %v250
    %v600 = vunpack.c.l.b16 %v251
    %v601 = vunpack.c.h.b16 %v251
    %v602 = vunpack.c.l.b16 %v252
    %v603 = vunpack.c.h.b16 %v252
    %v604 = vunpack.c.l.b16 %v253
    %v605 = vunpack.c.h.b16 %v253
    %v606 = vunpack.c.l.b16 %v254
    %v607 = vunpack.c.h.b16 %v254
    %v608 = vunpack.c.l.b16 %v255
    %v609 = vunpack.c.h.b16 %v255
    %v610 = vunpack.c.l.b16 %v256
    %v611 = vunpack.c.h.b16 %v256
    %v612 = vunpack.c.l.b16 %v257
    %v613 = vunpack.c.h.b16 %v257
    %v614 = vunpack.c.l.b16 %v258
    %v615 = vunpack.c.h.b16 %v258
    %v616 = vunpack.c.l.b16 %v259
    %v617 = vunpack.c.h.b16 %v259
    %v618 = vunpack.c.l.b16 %v260
    %v619 = vunpack.c.h.b16 %v260
    %v620 = vunpack.c.l.b16 %v261
    %v621 = vunpack.c.h.b16 %v261
    %v622 = vunpack.c.l.b16 %v262
    %v623 = vunpack.c.h.b16 %v262
    %v624 = vunpack.c.l.b16 %v263
    %v625 = vunpack.c.h.b16 %v263
    %v626 = vunpack.c.l.b16 %v264
    %v627 = vunpack.c.h.b16 %v264
    %v628 = vunpack.c.l.b16 %v265
    %v629 = vunpack.c.h.b16 %v265
    %v630 = vunpack.c.l.b16 %v266
    %v631 = vunpack.c.h.b16 %v266
    %v632 = vunpack.c.l.b16 %v267
    %v633 = vunpack.c.h.b16 %v267
    %v634 = vunpack.c.l.b16 %v268
    %v635 = vunpack.c.h.b16 %v268
    %v636 = vunpack.c.l.b16 %v269
    %v637 = vunpack.c.h.b16 %v269
    %v638 = vunpack.c.l.b16 %v270
    %v639 = vunpack.c.h.b16 %v270
    %v640 = vunpack.c.l.b16 %v271
    %v641 = vunpack.c.h.b16 %v271
    %v642 = vunpack.c.l.b16 %v272
    %v643 = vunpack.c.h.b16 %v272
    %v644 = vunpack.c.l.b16 %v273
    %v645 = vunpack.c.h.b16 %v273
    %v646 = vunpack.c.l.b16 %v274
    %v647 = vunpack.c.h.b16 %v274
    %v648 = vunpack.c.l.b16 %v275
    %v649 = vunpack.c.h.b16 %v275
    %v650 = vunpack.c.l.b16 %v276
    %v651 = vunpack.c.h.b16 %v276
    %v652 = vunpack.c.l.b16 %v277
    %v653 = vunpack.c.h.b16 %v277
    %v654 = vunpack.c.l.b16 %v278
    %v655 = vunpack.c.h.b16 %v278
    %v656 = vunpack.c.l.b16 %v279
    %v657 = vunpack.c.h.b16 %v279
    %v658 = vunpack.c.l.b16 %v280
    %v659 = vunpack.c.h.b16 %v280
    %v660 = vunpack.c.l.b16 %v281
    %v661 = vunpack.c.h.b16 %v281
    %v662 = vunpack.c.l.b16 %v282
    %v663 = vunpack.c.h.b16 %v282
    %v664 = vunpack.c.l.b16 %v283
    %v665 = vunpack.c.h.b16 %v283
    %v666 = vunpack.c.l.b16 %v284
    %v667 = vunpack.c.h.b16 %v284
    %v668 = vunpack.c.l.b16 %v285
    %v669 = vunpack.c.h.b16 %v285
    %v670 = vunpack.c.l.b16 %v286
    %v671 = vunpack.c.h.b16 %v286
    %v672 = vunpack.c.l.b16 %v287
    %v673 = vunpack.c.h.b16 %v287
    %v674 = vunpack.c.l.b16 %v288
    %v675 = vunpack.c.h.b16 %v288
    %v676 = vunpack.c.l.b16 %v289
    %v677 = vunpack.c.h.b16 %v289
    %v678 = vunpack.c.l.b16 %v290
    %v679 = vunpack.c.h.b16 %v290
    %v680 = vunpack.c.l.b16 %v291
    %v681 = vunpack.c.h.b16 %v291
    %v682 = vunpack.c.l.b16 %v292
    %v683 = vunpack.c.h.b16 %v292
    %v684 = vunpack.c.l.b16 %v293
    %v685 = vunpack.c.h.b16 %v293
    %v686 = vunpack.c.l.b16 %v294
    %v687 = vunpack.c.h.b16 %v294
    %v688 = vunpack.c.l.b16 %v295
    %v689 = vunpack.c.h.b16 %v295
    %v690 = vunpack.c.l.b16 %v296
    %v691 = vunpack.c.h.b16 %v296
    %v692 = vunpack.c.l.b16 %v297
    %v693 = vunpack.c.h.b16 %v297
    %v694 = vunpack.c.l.b16 %v298
    %v695 = vunpack.c.h.b16 %v298
    %v696 = vunpack.c.l.b16 %v299
    %v697 = vunpack.c.h.b16 %v299
    %v698 = vunpack.c.l.b16 %v300
    %v699 = vunpack.c.h.b16 %v300
    %v700 = vunpack.c.l.b16 %v301
    %v701 = vunpack.c.h.b16 %v301
    %v702 = vunpack.c.l.b16 %v302
    %v703 = vunpack.c.h.b16 %v302
    %v704 = vunpack.c.l.b16 %v303
    %v705 = vunpack.c.h.b16 %v303
    %v706 = vunpack.c.l.b16 %v304
    %v707 = vunpack.c.h.b16 %v304
    %v708 = vunpack.c.l.b16 %v305
    %v709 = vunpack.c.h.b16 %v305
    %v710 = vunpack.c.l.b16 %v306
    %v711 = vunpack.c.h.b16 %v306
    %v712 = vunpack.c.l.b16 %v307
    %v713 = vunpack.c.h.b16 %v307
    %v714 = vunpack.c.l.b16 %v308
    %v715 = vunpack.c.h.b16 %v308
    %v716 = vunpack.c.l.b16 %v309
    %v717 = vunpack.c.h.b16 %v309
    %v718 = vunpack.c.l.b16 %v310
    %v719 = vunpack.c.h.b16 %v310
    %v720 = vunpack.c.l.b16 %v311
    %v721 = vunpack.c.h.b16 %v311
    %v722 = vunpack.c.l.b16 %v312
    %v723 = vunpack.c.h.b16 %v312
    %v724 = vunpack.c.l.b16 %v313
    %v725 = vunpack.c.h.b16 %v313
    %v726 = vunpack.c.l.b16 %v314
    %v727 = vunpack.c.h.b16 %v314
    %v728 = vunpack.c.l.b16 %v315
    %v729 = vunpack.c.h.b16 %v315
    %v730 = vunpack.c.l.b16 %v316
    %v731 = vunpack.c.h.b16 %v316
    %v732 = vunpack.c.l.b16 %v317
    %v733 = vunpack.c.h.b16 %v317
    %v734 = vunpack.c.l.b16 %v318
    %v735 = vunpack.c.h.b16 %v318
    %v736 = vunpack.c.l.b16 %v319
    %v737 = vunpack.c.h.b16 %v319
    %v738 = vunpack.c.l.b16 %v320
    %v739 = vunpack.c.h.b16 %v320
    %v740 = vunpack.c.l.b16 %v321
    %v741 = vunpack.c.h.b16 %v321
    %v742 = vunpack.c.l.b16 %v322
    %v743 = vunpack.c.h.b16 %v322
    %v744 = vunpack.c.l.b16 %v323
    %v745 = vunpack.c.h.b16 %v323
    %v746 = vunpack.c.l.b16 %v324
    %v747 = vunpack.c.h.b16 %v324
    %v748 = vunpack.c.l.b16 %v325
    %v749 = vunpack.c.h.b16 %v325
    %v750 = vunpack.c.l.b16 %v326
    %v751 = vunpack.c.h.b16 %v326
    %v752 = vunpack.c.l.b16 %v327
    %v753 = vunpack.c.h.b16 %v327
    %v754 = vunpack.c.l.b16 %v328
    %v755 = vunpack.c.h.b16 %v328
    %v756 = vunpack.c.l.b16 %v329
    %v757 = vunpack.c.h.b16 %v329
    %v758 = vunpack.c.l.b16 %v330
    %v759 = vunpack.c.h.b16 %v330
    %v760 = vunpack.c.l.b16 %v331
    %v761 = vunpack.c.h.b16 %v331
    %v762 = vunpack.c.l.b16 %v332
    %v763 = vunpack.c.h.b16 %v332
    %v764 = vunpack.c.l.b16 %v333
    %v765 = vunpack.c.h.b16 %v333
    %v766 = vunpack.c.l.b16 %v334
    %v767 = vunpack.c.h.b16 %v334
    %v768 = vunpack.c.l.b16 %v335
    %v769 = vunpack.c.h.b16 %v335
    %v770 = vunpack.c.l.b16 %v336
    %v771 = vunpack.c.h.b16 %v336
    %v772 = vunpack.c.l.b16 %v337
    %v773 = vunpack.c.h.b16 %v337
    %v774 = vunpack.c.l.b16 %v338
    %v775 = vunpack.c.h.b16 %v338
    %v776 = vunpack.c.l.b16 %v339
    %v777 = vunpack.c.h.b16 %v339
    %v778 = vunpack.c.l.b16 %v340
    %v779 = vunpack.c.h.b16 %v340
    %v780 = vunpack.c.l.b16 %v341
    %v781 = vunpack.c.h.b16 %v341
    %v782 = vunpack.c.l.b16 %v342
    %v783 = vunpack.c.h.b16 %v342
    %v784 = vunpack.c.l.b16 %v343
    %v785 = vunpack.c.h.b16 %v343
    %v786 = vunpack.c.l.b16 %v344
    %v787 = vunpack.c.h.b16 %v344
    %v788 = vunpack.c.l.b16 %v345
    %v789 = vunpack.c.h.b16 %v345
    %v790 = vunpack.c.l.b16 %v346
    %v791 = vunpack.c.h.b16 %v346
    %v792 = vunpack.c.l.b16 %v347
    %v793 = vunpack.c.h.b16 %v347
    %v794 = vunpack.c.l.b16 %v348
    %v795 = vunpack.c.h.b16 %v348
    %v796 = vunpack.c.l.b16 %v349
    %v797 = vunpack.c.h.b16 %v349
    %v798 = vunpack.c.l.b16 %v350
    %v799 = vunpack.c.h.b16 %v350
    %v800 = vunpack.c.l.b16 %v351
    %v801 = vunpack.c.h.b16 %v351
    %v802 = vunpack.c.l.b16 %v352
    %v803 = vunpack.c.h.b16 %v352
    %v804 = vunpack.c.l.b16 %v353
    %v805 = vunpack.c.h.b16 %v353
    %v806 = vunpack.c.l.b16 %v354
    %v807 = vunpack.c.h.b16 %v354
    %v808 = vunpack.c.l.b16 %v355
    %v809 = vunpack.c.h.b16 %v355
    %v810 = vunpack.c.l.b16 %v356
    %v811 = vunpack.c.h.b16 %v356
    %v812 = vunpack.c.l.b16 %v357
    %v813 = vunpack.c.h.b16 %v357
    %v814 = vunpack.c.l.b16 %v358
    %v815 = vunpack.c.h.b16 %v358
    %v816 = vunpack.c.l.b16 %v359
    %v817 = vunpack.c.h.b16 %v359
    %v818 = vunpack.c.l.b16 %v360
    %v819 = vunpack.c.h.b16 %v360
    %v820 = vunpack.c.l.b16 %v361
    %v821 = vunpack.c.h.b16 %v361
    %v822 = vunpack.c.l.b16 %v362
    %v823 = vunpack.c.h.b16 %v362
    %v824 = vunpack.c.l.b16 %v363
    %v825 = vunpack.c.h.b16 %v363
    %v826 = vunpack.c.l.b16 %v364
    %v827 = vunpack.c.h.b16 %v364
    %v828 = vunpack.c.l.b16 %v365
    %v829 = vunpack.c.h.b16 %v365
    %v830 = vunpack.c.l.b16 %v366
    %v831 = vunpack.c.h.b16 %v366
    %v832 = vunpack.c.l.b16 %v367
    %v833 = vunpack.c.h.b16 %v367
    %v834 = vunpack.c.l.b16 %v368
    %v835 = vunpack.c.h.b16 %v368
    %v836 = vunpack.c.l.b16 %v369
    %v837 = vunpack.c.h.b16 %v369
    %v838 = vunpack.c.l.b16 %v370
    %v839 = vunpack.c.h.b16 %v370
    %v840 = vunpack.c.l.b16 %v371
    %v841 = vunpack.c.h.b16 %v371
    %v842 = vunpack.c.l.b16 %v372
    %v843 = vunpack.c.h.b16 %v372
    %v844 = vunpack.c.l.b16 %v373
    %v845 = vunpack.c.h.b16 %v373
    %v846 = vunpack.c.l.b16 %v374
    %v847 = vunpack.c.h.b16 %v374
    %v848 = vunpack.c.l.b16 %v375
    %v849 = vunpack.c.h.b16 %v375
    %v850 = vunpack.c.l.b16 %v376
    %v851 = vunpack.c.h.b16 %v376
    %v852 = vunpack.c.l.b16 %v377
    %v853 = vunpack.c.h.b16 %v377
    %v854 = vunpack.c.l.b16 %v378
    %v855 = vunpack.c.h.b16 %v378
    %v856 = vunpack.c.l.b16 %v379
    %v857 = vunpack.c.h.b16 %v379
    %v858 = vunpack.c.l.b16 %v380
    %v859 = vunpack.c.h.b16 %v380
    %v860 = vunpack.c.l.b16 %v381
    %v861 = vunpack.c.h.b16 %v381
    %v862 = vunpack.c.l.b16 %v382
    %v863 = vunpack.c.h.b16 %v382
    %v864 = vunpack.c.l.b16 %v383
    %v865 = vunpack.c.h.b16 %v383
    %v866 = vunpack.c.l.b16 %v384
    %v867 = vunpack.c.h.b16 %v384
    %v868 = vunpack.c.l.b16 %v385
    %v869 = vunpack.c.h.b16 %v385
    %v870 = vunpack.c.l.b16 %v386
    %v871 = vunpack.c.h.b16 %v386
    %v872 = vunpack.c.l.b16 %v387
    %v873 = vunpack.c.h.b16 %v387
    %v874 = vunpack.c.l.b16 %v388
    %v875 = vunpack.c.h.b16 %v388
    %v876 = vunpack.c.l.b16 %v389
    %v877 = vunpack.c.h.b16 %v389
    %v878 = vunpack.c.l.b16 %v390
    %v879 = vunpack.c.h.b16 %v390
    %v880 = vunpack.c.l.b16 %v391
    %v881 = vunpack.c.h.b16 %v391
    %v882 = vpack.c.b16 %v566, %v562
    %v883 = vpack.c.b16 %v567, %v563
    %v884 = vpack.c.b16 %v568, %v564
    %v885 = vpack.c.b16 %v569, %v565
    %v886 = vpack.c.b16 %v574, %v570
    %v887 = vpack.c.b16 %v575, %v571
    %v888 = vpack.c.b16 %v576, %v572
    %v889 = vpack.c.b16 %v577, %v573
    %v890 = vpack.c.b16 %v582, %v578
    %v891 = vpack.c.b16 %v583, %v579
    %v892 = vpack.c.b16 %v584, %v580
    %v893 = vpack.c.b16 %v585, %v581
    %v894 = vpack.c.b16 %v590, %v586
    %v895 = vpack.c.b16 %v591, %v587
    %v896 = vpack.c.b16 %v592, %v588
    %v897 = vpack.c.b16 %v593, %v589
    %v898 = vpack.c.b16 %v598, %v594
    %v899 = vpack.c.b16 %v599, %v595
    %v900 = vpack.c.b16 %v600, %v596
    %v901 = vpack.c.b16 %v601, %v597
    %v902 = vpack.c.b16 %v606, %v602
    %v903 = vpack.c.b16 %v607, %v603
    %v904 = vpack.c.b16 %v608, %v604
    %v905 = vpack.c.b16 %v609, %v605
    %v906 = vpack.c.b16 %v614, %v610
    %v907 = vpack.c.b16 %v615, %v611
    %v908 = vpack.c.b16 %v616, %v612
    %v909 = vpack.c.b16 %v617, %v613
    %v910 = vpack.c.b16 %v622, %v618
    %v911 = vpack.c.b16 %v623, %v619
    %v912 = vpack.c.b16 %v624, %v620
    %v913 = vpack.c.b16 %v625, %v621
    %v914 = vpack.c.b16 %v630, %v626
    %v915 = vpack.c.b16 %v631, %v627
    %v916 = vpack.c.b16 %v632, %v628
    %v917 = vpack.c.b16 %v633, %v629
    %v918 = vpack.c.b16 %v638, %v634
    %v919 = vpack.c.b16 %v639, %v635
    %v920 = vpack.c.b16 %v640, %v636
    %v921 = vpack.c.b16 %v641, %v637
    %v922 = vpack.c.b16 %v646, %v642
    %v923 = vpack.c.b16 %v647, %v643
    %v924 = vpack.c.b16 %v648, %v644
    %v925 = vpack.c.b16 %v649, %v645
    %v926 = vpack.c.b16 %v654, %v650
    %v927 = vpack.c.b16 %v655, %v651
    %v928 = vpack.c.b16 %v656, %v652
    %v929 = vpack.c.b16 %v657, %v653
    %v930 = vpack.c.b16 %v662, %v658
    %v931 = vpack.c.b16 %v663, %v659
    %v932 = vpack.c.b16 %v664, %v660
    %v933 = vpack.c.b16 %v665, %v661
    %v934 = vpack.c.b16 %v670, %v666
    %v935 = vpack.c.b16 %v671, %v667
    %v936 = vpack.c.b16 %v672, %v668
    %v937 = vpack.c.b16 %v673, %v669
    %v938 = vpack.c.b16 %v678, %v674
    %v939 = vpack.c.b16 %v679, %v675
    %v940 = vpack.c.b16 %v680, %v676
    %v941 = vpack.c.b16 %v681, %v677
    %v942 = vpack.c.b16 %v686, %v682
    %v943 = vpack.c.b16 %v687, %v683
    %v944 = vpack.c.b16 %v688, %v684
    %v945 = vpack.c.b16 %v689, %v685
    %v946 = vpack.c.b16 %v694, %v690
    %v947 = vpack.c.b16 %v695, %v691
    %v948 = vpack.c.b16 %v696, %v692
    %v949 = vpack.c.b16 %v697, %v693
    %v950 = vpack.c.b16 %v702, %v698
    %v951 = vpack.c.b16 %v703, %v699
    %v952 = vpack.c.b16 %v704, %v700
    %v953 = vpack.c.b16 %v705, %v701
    %v954 = vpack.c.b16 %v710, %v706
    %v955 = vpack.c.b16 %v711, %v707
    %v956 = vpack.c.b16 %v712, %v708
    %v957 = vpack.c.b16 %v713, %v709
    %v958 = vpack.c.b16 %v718, %v714
    %v959 = vpack.c.b16 %v719, %v715
    %v960 = vpack.c.b16 %v720, %v716
    %v961 = vpack.c.b16 %v721, %v717
    %v962 = vpack.c.b16 %v726, %v722
    %v963 = vpack.c.b16 %v727, %v723
    %v964 = vpack.c.b16 %v728, %v724
    %v965 = vpack.c.b16 %v729, %v725
    %v966 = vpack.c.b16 %v734, %v730
    %v967 = vpack.c.b16 %v735, %v731
    %v968 = vpack.c.b16 %v736, %v732
    %v969 = vpack.c.b16 %v737, %v733
    %v970 = vpack.c.b16 %v742, %v738
    %v971 = vpack.c.b16 %v743, %v739
    %v972 = vpack.c.b16 %v744, %v740
    %v973 = vpack.c.b16 %v745, %v741
    %v974 = vpack.c.b16 %v750, %v746
    %v975 = vpack.c.b16 %v751, %v747
    %v976 = vpack.c.b16 %v752, %v748
    %v977 = vpack.c.b16 %v753, %v749
    %v978 = vpack.c.b16 %v758, %v754
    %v979 = vpack.c.b16 %v759, %v755
    %v980 = vpack.c.b16 %v760, %v756
    %v981 = vpack.c.b16 %v761, %v757
    %v982 = vpack.c.b16 %v766, %v762
    %v983 = vpack.c.b16 %v767, %v763
    %v984 = vpack.c.b16 %v768, %v764
    %v985 = vpack.c.b16 %v769, %v765
    %v986 = vpack.c.b16 %v774, %v770
    %v987 = vpack.c.b16 %v775, %v771
    %v988 = vpack.c.b16 %v776, %v772
    %v989 = vpack.c.b16 %v777, %v773
    %v990 = vpack.c.b16 %v782, %v778
    %v991 = vpack.c.b16 %v783, %v779
    %v992 = vpack.c.b16 %v784, %v780
    %v993 = vpack.c.b16 %v785, %v781
    %v994 = vpack.c.b16 %v790, %v786
    %v995 = vpack.c.b16 %v791, %v787
    %v996 = vpack.c.b16 %v792, %v788
    %v997 = vpack.c.b16 %v793, %v789
    %v998 = vpack.c.b16 %v798, %v794
    %v999 = vpack.c.b16 %v799, %v795
    %v1000 = vpack.c.b16 %v800, %v796
    %v1001 = vpack.c.b16 %v801, %v797
    %v1002 = vpack.c.b16 %v806, %v802
    %v1003 = vpack.c.b16 %v807, %v803
    %v1004 = vpack.c.b16 %v808, %v804
    %v1005 = vpack.c.b16 %v809, %v805
    %v1006 = vpack.c.b16 %v814, %v810
    %v1007 = vpack.c.b16 %v815, %v811
    %v1008 = vpack.c.b16 %v816, %v812
    %v1009 = vpack.c.b16 %v817, %v813
    %v1010 = vpack.c.b16 %v822, %v818
    %v1011 = vpack.c.b16 %v823, %v819
    %v1012 = vpack.c.b16 %v824, %v820
    %v1013 = vpack.c.b16 %v825, %v821
    %v1014 = vpack.c.b16 %v830, %v826
    %v1015 = vpack.c.b16 %v831, %v827
    %v1016 = vpack.c.b16 %v832, %v828
    %v1017 = vpack.c.b16 %v833, %v829
    %v1018 = vpack.c.b16 %v838, %v834
    %v1019 = vpack.c.b16 %v839, %v835
    %v1020 = vpack.c.b16 %v840, %v836
    %v1021 = vpack.c.b16 %v841, %v837
    %v1022 = vpack.c.b16 %v846, %v842
    %v1023 = vpack.c.b16 %v847, %v843
    %v1024 = vpack.c.b16 %v848, %v844
    %v1025 = vpack.c.b16 %v849, %v845
    %v1026 = vpack.c.b16 %v854, %v850
    %v1027 = vpack.c.b16 %v855, %v851
    %v1028 = vpack.c.b16 %v856, %v852
    %v1029 = vpack.c.b16 %v857, %v853
    %v1030 = vpack.c.b16 %v862, %v858
    %v1031 = vpack.c.b16 %v863, %v859
    %v1032 = vpack.c.b16 %v864, %v860
    %v1033 = vpack.c.b16 %v865, %v861
    %v1034 = vpack.c.b16 %v870, %v866
    %v1035 = vpack.c.b16 %v871, %v867
    %v1036 = vpack.c.b16 %v872, %v868
    %v1037 = vpack.c.b16 %v873, %v869
    %v1038 = vpack.c.b16 %v878, %v874
    %v1039 = vpack.c.b16 %v879, %v875
    %v1040 = vpack.c.b16 %v880, %v876
    %v1041 = vpack.c.b16 %v881, %v877
    %1202 = vmatpush.bf16.msra.mxu0 %v910
    %1203 = vmatpush.bf16.msra.mxu0 %v906
    %1204 = vmatpush.bf16.msra.mxu0 %v902
    %1205 = vmatpush.bf16.msra.mxu0 %v898
    %1206 = vmatpush.bf16.msra.mxu0 %v894
    %1207 = vmatpush.bf16.msra.mxu0 %v890
    %1208 = vmatpush.bf16.msra.mxu0 %v886
    %1209 = vmatpush.bf16.msra.mxu0 %v882
    %1210 = vmatmul.bf16.gmra.mxu0 %v227
    %v1211 = vpop.f32.mrf.mxu0
    %v1212 = vadd.f32 %v394, %v1211
    %v1213 = vpop.f32.mrf.mxu0
    %1214 = vdwg.mxu0
    %1215 = vmatpush.bf16.msra.mxu0 %v942
    %1216 = vmatpush.bf16.msra.mxu0 %v938
    %1217 = vmatpush.bf16.msra.mxu0 %v934
    %1218 = vmatpush.bf16.msra.mxu0 %v930
    %1219 = vmatpush.bf16.msra.mxu0 %v926
    %1220 = vmatpush.bf16.msra.mxu0 %v922
    %1221 = vmatpush.bf16.msra.mxu0 %v918
    %1222 = vmatpush.bf16.msra.mxu0 %v914
    %1223 = vmatmul.bf16.gmra.mxu0 %v228
    %v1224 = vpop.f32.mrf.mxu0
    %v1225 = vadd.f32 %v1212, %v1224
    %v1226 = vpop.f32.mrf.mxu0
    %1227 = vdwg.mxu0
    %1228 = vmatpush.bf16.msra.mxu0 %v974
    %1229 = vmatpush.bf16.msra.mxu0 %v970
    %1230 = vmatpush.bf16.msra.mxu0 %v966
    %1231 = vmatpush.bf16.msra.mxu0 %v962
    %1232 = vmatpush.bf16.msra.mxu0 %v958
    %1233 = vmatpush.bf16.msra.mxu0 %v954
    %1234 = vmatpush.bf16.msra.mxu0 %v950
    %1235 = vmatpush.bf16.msra.mxu0 %v946
    %1236 = vmatmul.bf16.gmra.mxu0 %v229
    %v1237 = vpop.f32.mrf.mxu0
    %v1238 = vadd.f32 %v1225, %v1237
    %v1239 = vpop.f32.mrf.mxu0
    %1240 = vdwg.mxu0
    %1241 = vmatpush.bf16.msra.mxu0 %v1006
    %1242 = vmatpush.bf16.msra.mxu0 %v1002
    %1243 = vmatpush.bf16.msra.mxu0 %v998
    %1244 = vmatpush.bf16.msra.mxu0 %v994
    %1245 = vmatpush.bf16.msra.mxu0 %v990
    %1246 = vmatpush.bf16.msra.mxu0 %v986
    %1247 = vmatpush.bf16.msra.mxu0 %v982
    %1248 = vmatpush.bf16.msra.mxu0 %v978
    %1249 = vmatmul.bf16.gmra.mxu0 %v230
    %v1250 = vpop.f32.mrf.mxu0
    %v1251 = vadd.f32 %v1238, %v1250
    %v1252 = vpop.f32.mrf.mxu0
    %1253 = vdwg.mxu0
    %1254 = vmatpush.bf16.msra.mxu0 %v1038
    %1255 = vmatpush.bf16.msra.mxu0 %v1034
    %1256 = vmatpush.bf16.msra.mxu0 %v1030
    %1257 = vmatpush.bf16.msra.mxu0 %v1026
    %1258 = vmatpush.bf16.msra.mxu0 %v1022
    %1259 = vmatpush.bf16.msra.mxu0 %v1018
    %1260 = vmatpush.bf16.msra.mxu0 %v1014
    %1261 = vmatpush.bf16.msra.mxu0 %v1010
    %1262 = vmatmul.bf16.gmra.mxu0 %v231
    %v1263 = vpop.f32.mrf.mxu0
    %v1264 = vadd.f32 %v1251, %v1263
    %v1265 = vpop.f32.mrf.mxu0
    %1266 = vdwg.mxu0
    %1267 = vmatpush.bf16.msra.mxu0 %v911
    %1268 = vmatpush.bf16.msra.mxu0 %v907
    %1269 = vmatpush.bf16.msra.mxu0 %v903
    %1270 = vmatpush.bf16.msra.mxu0 %v899
    %1271 = vmatpush.bf16.msra.mxu0 %v895
    %1272 = vmatpush.bf16.msra.mxu0 %v891
    %1273 = vmatpush.bf16.msra.mxu0 %v887
    %1274 = vmatpush.bf16.msra.mxu0 %v883
    %1275 = vmatmul.bf16.gmra.mxu0 %v227
    %v1276 = vpop.f32.mrf.mxu0
    %v1277 = vadd.f32 %v395, %v1276
    %v1278 = vpop.f32.mrf.mxu0
    %1279 = vdwg.mxu0
    %1280 = vmatpush.bf16.msra.mxu0 %v943
    %1281 = vmatpush.bf16.msra.mxu0 %v939
    %1282 = vmatpush.bf16.msra.mxu0 %v935
    %1283 = vmatpush.bf16.msra.mxu0 %v931
    %1284 = vmatpush.bf16.msra.mxu0 %v927
    %1285 = vmatpush.bf16.msra.mxu0 %v923
    %1286 = vmatpush.bf16.msra.mxu0 %v919
    %1287 = vmatpush.bf16.msra.mxu0 %v915
    %1288 = vmatmul.bf16.gmra.mxu0 %v228
    %v1289 = vpop.f32.mrf.mxu0
    %v1290 = vadd.f32 %v1277, %v1289
    %v1291 = vpop.f32.mrf.mxu0
    %1292 = vdwg.mxu0
    %1293 = vmatpush.bf16.msra.mxu0 %v975
    %1294 = vmatpush.bf16.msra.mxu0 %v971
    %1295 = vmatpush.bf16.msra.mxu0 %v967
    %1296 = vmatpush.bf16.msra.mxu0 %v963
    %1297 = vmatpush.bf16.msra.mxu0 %v959
    %1298 = vmatpush.bf16.msra.mxu0 %v955
    %1299 = vmatpush.bf16.msra.mxu0 %v951
    %1300 = vmatpush.bf16.msra.mxu0 %v947
    %1301 = vmatmul.bf16.gmra.mxu0 %v229
    %v1302 = vpop.f32.mrf.mxu0
    %v1303 = vadd.f32 %v1290, %v1302
    %v1304 = vpop.f32.mrf.mxu0
    %1305 = vdwg.mxu0
    %1306 = vmatpush.bf16.msra.mxu0 %v1007
    %1307 = vmatpush.bf16.msra.mxu0 %v1003
    %1308 = vmatpush.bf16.msra.mxu0 %v999
    %1309 = vmatpush.bf16.msra.mxu0 %v995
    %1310 = vmatpush.bf16.msra.mxu0 %v991
    %1311 = vmatpush.bf16.msra.mxu0 %v987
    %1312 = vmatpush.bf16.msra.mxu0 %v983
    %1313 = vmatpush.bf16.msra.mxu0 %v979
    %1314 = vmatmul.bf16.gmra.mxu0 %v230
    %v1315 = vpop.f32.mrf.mxu0
    %v1316 = vadd.f32 %v1303, %v1315
    %v1317 = vpop.f32.mrf.mxu0
    %1318 = vdwg.mxu0
    %1319 = vmatpush.bf16.msra.mxu0 %v1039
    %1320 = vmatpush.bf16.msra.mxu0 %v1035
    %1321 = vmatpush.bf16.msra.mxu0 %v1031
    %1322 = vmatpush.bf16.msra.mxu0 %v1027
    %1323 = vmatpush.bf16.msra.mxu0 %v1023
    %1324 = vmatpush.bf16.msra.mxu0 %v1019
    %1325 = vmatpush.bf16.msra.mxu0 %v1015
    %1326 = vmatpush.bf16.msra.mxu0 %v1011
    %1327 = vmatmul.bf16.gmra.mxu0 %v231
    %v1328 = vpop.f32.mrf.mxu0
    %v1329 = vadd.f32 %v1316, %v1328
    %v1330 = vpop.f32.mrf.mxu0
    %1331 = vdwg.mxu0
    %1332 = vmatpush.bf16.msra.mxu0 %v912
    %1333 = vmatpush.bf16.msra.mxu0 %v908
    %1334 = vmatpush.bf16.msra.mxu0 %v904
    %1335 = vmatpush.bf16.msra.mxu0 %v900
    %1336 = vmatpush.bf16.msra.mxu0 %v896
    %1337 = vmatpush.bf16.msra.mxu0 %v892
    %1338 = vmatpush.bf16.msra.mxu0 %v888
    %1339 = vmatpush.bf16.msra.mxu0 %v884
    %1340 = vmatmul.bf16.gmra.mxu0 %v227
    %v1341 = vpop.f32.mrf.mxu0
    %v1342 = vadd.f32 %v396, %v1341
    %v1343 = vpop.f32.mrf.mxu0
    %1344 = vdwg.mxu0
    %1345 = vmatpush.bf16.msra.mxu0 %v944
    %1346 = vmatpush.bf16.msra.mxu0 %v940
    %1347 = vmatpush.bf16.msra.mxu0 %v936
    %1348 = vmatpush.bf16.msra.mxu0 %v932
    %1349 = vmatpush.bf16.msra.mxu0 %v928
    %1350 = vmatpush.bf16.msra.mxu0 %v924
    %1351 = vmatpush.bf16.msra.mxu0 %v920
    %1352 = vmatpush.bf16.msra.mxu0 %v916
    %1353 = vmatmul.bf16.gmra.mxu0 %v228
    %v1354 = vpop.f32.mrf.mxu0
    %v1355 = vadd.f32 %v1342, %v1354
    %v1356 = vpop.f32.mrf.mxu0
    %1357 = vdwg.mxu0
    %1358 = vmatpush.bf16.msra.mxu0 %v976
    %1359 = vmatpush.bf16.msra.mxu0 %v972
    %1360 = vmatpush.bf16.msra.mxu0 %v968
    %1361 = vmatpush.bf16.msra.mxu0 %v964
    %1362 = vmatpush.bf16.msra.mxu0 %v960
    %1363 = vmatpush.bf16.msra.mxu0 %v956
    %1364 = vmatpush.bf16.msra.mxu0 %v952
    %1365 = vmatpush.bf16.msra.mxu0 %v948
    %1366 = vmatmul.bf16.gmra.mxu0 %v229
    %v1367 = vpop.f32.mrf.mxu0
    %v1368 = vadd.f32 %v1355, %v1367
    %v1369 = vpop.f32.mrf.mxu0
    %1370 = vdwg.mxu0
    %1371 = vmatpush.bf16.msra.mxu0 %v1008
    %1372 = vmatpush.bf16.msra.mxu0 %v1004
    %1373 = vmatpush.bf16.msra.mxu0 %v1000
    %1374 = vmatpush.bf16.msra.mxu0 %v996
    %1375 = vmatpush.bf16.msra.mxu0 %v992
    %1376 = vmatpush.bf16.msra.mxu0 %v988
    %1377 = vmatpush.bf16.msra.mxu0 %v984
    %1378 = vmatpush.bf16.msra.mxu0 %v980
    %1379 = vmatmul.bf16.gmra.mxu0 %v230
    %v1380 = vpop.f32.mrf.mxu0
    %v1381 = vadd.f32 %v1368, %v1380
    %v1382 = vpop.f32.mrf.mxu0
    %1383 = vdwg.mxu0
    %1384 = vmatpush.bf16.msra.mxu0 %v1040
    %1385 = vmatpush.bf16.msra.mxu0 %v1036
    %1386 = vmatpush.bf16.msra.mxu0 %v1032
    %1387 = vmatpush.bf16.msra.mxu0 %v1028
    %1388 = vmatpush.bf16.msra.mxu0 %v1024
    %1389 = vmatpush.bf16.msra.mxu0 %v1020
    %1390 = vmatpush.bf16.msra.mxu0 %v1016
    %1391 = vmatpush.bf16.msra.mxu0 %v1012
    %1392 = vmatmul.bf16.gmra.mxu0 %v231
    %v1393 = vpop.f32.mrf.mxu0
    %v1394 = vadd.f32 %v1381, %v1393
    %v1395 = vpop.f32.mrf.mxu0
    %1396 = vdwg.mxu0
    %1397 = vmatpush.bf16.msra.mxu0 %v913
    %1398 = vmatpush.bf16.msra.mxu0 %v909
    %1399 = vmatpush.bf16.msra.mxu0 %v905
    %1400 = vmatpush.bf16.msra.mxu0 %v901
    %1401 = vmatpush.bf16.msra.mxu0 %v897
    %1402 = vmatpush.bf16.msra.mxu0 %v893
    %1403 = vmatpush.bf16.msra.mxu0 %v889
    %1404 = vmatpush.bf16.msra.mxu0 %v885
    %1405 = vmatmul.bf16.gmra.mxu0 %v227
    %v1406 = vpop.f32.mrf.mxu0
    %v1407 = vadd.f32 %v397, %v1406
    %v1408 = vpop.f32.mrf.mxu0
    %1409 = vdwg.mxu0
    %1410 = vmatpush.bf16.msra.mxu0 %v945
    %1411 = vmatpush.bf16.msra.mxu0 %v941
    %1412 = vmatpush.bf16.msra.mxu0 %v937
    %1413 = vmatpush.bf16.msra.mxu0 %v933
    %1414 = vmatpush.bf16.msra.mxu0 %v929
    %1415 = vmatpush.bf16.msra.mxu0 %v925
    %1416 = vmatpush.bf16.msra.mxu0 %v921
    %1417 = vmatpush.bf16.msra.mxu0 %v917
    %1418 = vmatmul.bf16.gmra.mxu0 %v228
    %v1419 = vpop.f32.mrf.mxu0
    %v1420 = vadd.f32 %v1407, %v1419
    %v1421 = vpop.f32.mrf.mxu0
    %1422 = vdwg.mxu0
    %1423 = vmatpush.bf16.msra.mxu0 %v977
    %1424 = vmatpush.bf16.msra.mxu0 %v973
    %1425 = vmatpush.bf16.msra.mxu0 %v969
    %1426 = vmatpush.bf16.msra.mxu0 %v965
    %1427 = vmatpush.bf16.msra.mxu0 %v961
    %1428 = vmatpush.bf16.msra.mxu0 %v957
    %1429 = vmatpush.bf16.msra.mxu0 %v953
    %1430 = vmatpush.bf16.msra.mxu0 %v949
    %1431 = vmatmul.bf16.gmra.mxu0 %v229
    %v1432 = vpop.f32.mrf.mxu0
    %v1433 = vadd.f32 %v1420, %v1432
    %v1434 = vpop.f32.mrf.mxu0
    %1435 = vdwg.mxu0
    %1436 = vmatpush.bf16.msra.mxu0 %v1009
    %1437 = vmatpush.bf16.msra.mxu0 %v1005
    %1438 = vmatpush.bf16.msra.mxu0 %v1001
    %1439 = vmatpush.bf16.msra.mxu0 %v997
    %1440 = vmatpush.bf16.msra.mxu0 %v993
    %1441 = vmatpush.bf16.msra.mxu0 %v989
    %1442 = vmatpush.bf16.msra.mxu0 %v985
    %1443 = vmatpush.bf16.msra.mxu0 %v981
    %1444 = vmatmul.bf16.gmra.mxu0 %v230
    %v1445 = vpop.f32.mrf.mxu0
    %v1446 = vadd.f32 %v1433, %v1445
    %v1447 = vpop.f32.mrf.mxu0
    %1448 = vdwg.mxu0
    %1449 = vmatpush.bf16.msra.mxu0 %v1041
    %1450 = vmatpush.bf16.msra.mxu0 %v1037
    %1451 = vmatpush.bf16.msra.mxu0 %v1033
    %1452 = vmatpush.bf16.msra.mxu0 %v1029
    %1453 = vmatpush.bf16.msra.mxu0 %v1025
    %1454 = vmatpush.bf16.msra.mxu0 %v1021
    %1455 = vmatpush.bf16.msra.mxu0 %v1017
    %1456 = vmatpush.bf16.msra.mxu0 %v1013
    %1457 = vmatmul.bf16.gmra.mxu0 %v231
    %v1458 = vpop.f32.mrf.mxu0
    %v1459 = vadd.f32 %v1446, %v1458
    %v1460 = vpop.f32.mrf.mxu0
    %1461 = vdwg.mxu0
    %v1462 = vmax.f32 %v1264, 0.0
    %v1463 = vmax.f32 %v1329, 0.0
    %v1464 = vmax.f32 %v1394, 0.0
    %v1465 = vmax.f32 %v1459, 0.0
    %v1466 = vpack.c.bf16 %v1462, %v1462
    %v1467 = vpack.c.bf16 %v1463, %v1463
    %v1468 = vpack.c.bf16 %v1464, %v1464
    %v1469 = vpack.c.bf16 %v1465, %v1465
    %v1470 = vld [vmem:[%s5] sm:$0xf]
    %v1471 = vld [vmem:[%s5 + $0x4] sm:$0xf]
    %v1472 = vld [vmem:[%s5 + $0x8] sm:$0xf]
    %v1473 = vld [vmem:[%s5 + $0xc] sm:$0xf]
    %v1474 = vld [vmem:[%s5 + $0x10] sm:$0xf]
    %v1475 = vld [vmem:[%s5 + $0x14] sm:$0xf]
    %v1476 = vld [vmem:[%s5 + $0x18] sm:$0xf]
    %v1477 = vld [vmem:[%s5 + $0x1c] sm:$0xf]
    %v1478 = vld [vmem:[%s5 + $0x20] sm:$0xf]
    %v1479 = vld [vmem:[%s5 + $0x24] sm:$0xf]
    %v1480 = vld [vmem:[%s5 + $0x28] sm:$0xf]
    %v1481 = vld [vmem:[%s5 + $0x2c] sm:$0xf]
    %v1482 = vld [vmem:[%s5 + $0x30] sm:$0xf]
    %v1483 = vld [vmem:[%s5 + $0x34] sm:$0xf]
    %v1484 = vld [vmem:[%s5 + $0x38] sm:$0xf]
    %v1485 = vld [vmem:[%s5 + $0x3c] sm:$0xf]
    %v1486 = vld [vmem:[%s5 + $0x40] sm:$0xf]
    %v1487 = vld [vmem:[%s5 + $0x44] sm:$0xf]
    %v1488 = vld [vmem:[%s5 + $0x48] sm:$0xf]
    %v1489 = vld [vmem:[%s5 + $0x4c] sm:$0xf]
    %v1490 = vld [vmem:[%s5 + $0x50] sm:$0xf]
    %v1491 = vld [vmem:[%s5 + $0x54] sm:$0xf]
    %v1492 = vld [vmem:[%s5 + $0x58] sm:$0xf]
    %v1493 = vld [vmem:[%s5 + $0x5c] sm:$0xf]
    %v1494 = vld [vmem:[%s5 + $0x60] sm:$0xf]
    %v1495 = vld [vmem:[%s5 + $0x64] sm:$0xf]
    %v1496 = vld [vmem:[%s5 + $0x68] sm:$0xf]
    %v1497 = vld [vmem:[%s5 + $0x6c] sm:$0xf]
    %v1498 = vld [vmem:[%s5 + $0x70] sm:$0xf]
    %v1499 = vld [vmem:[%s5 + $0x74] sm:$0xf]
    %v1500 = vld [vmem:[%s5 + $0x78] sm:$0xf]
    %v1501 = vld [vmem:[%s5 + $0x7c] sm:$0xf]
    %v1502 = vld [vmem:[%s5 + $0x80] sm:$0xf]
    %v1503 = vld [vmem:[%s5 + $0x84] sm:$0xf]
    %v1504 = vld [vmem:[%s5 + $0x88] sm:$0xf]
    %v1505 = vld [vmem:[%s5 + $0x8c] sm:$0xf]
    %v1506 = vld [vmem:[%s5 + $0x90] sm:$0xf]
    %v1507 = vld [vmem:[%s5 + $0x94] sm:$0xf]
    %v1508 = vld [vmem:[%s5 + $0x98] sm:$0xf]
    %v1509 = vld [vmem:[%s5 + $0x9c] sm:$0xf]
    %v1510 = vld [vmem:[%s5 + $0xa0] sm:$0xf]
    %v1511 = vld [vmem:[%s5 + $0xa4] sm:$0xf]
    %v1512 = vld [vmem:[%s5 + $0xa8] sm:$0xf]
    %v1513 = vld [vmem:[%s5 + $0xac] sm:$0xf]
    %v1514 = vld [vmem:[%s5 + $0xb0] sm:$0xf]
    %v1515 = vld [vmem:[%s5 + $0xb4] sm:$0xf]
    %v1516 = vld [vmem:[%s5 + $0xb8] sm:$0xf]
    %v1517 = vld [vmem:[%s5 + $0xbc] sm:$0xf]
    %v1518 = vld [vmem:[%s5 + $0xc0] sm:$0xf]
    %v1519 = vld [vmem:[%s5 + $0xc4] sm:$0xf]
    %v1520 = vld [vmem:[%s5 + $0xc8] sm:$0xf]
    %v1521 = vld [vmem:[%s5 + $0xcc] sm:$0xf]
    %v1522 = vld [vmem:[%s5 + $0xd0] sm:$0xf]
    %v1523 = vld [vmem:[%s5 + $0xd4] sm:$0xf]
    %v1524 = vld [vmem:[%s5 + $0xd8] sm:$0xf]
    %v1525 = vld [vmem:[%s5 + $0xdc] sm:$0xf]
    %v1526 = vld [vmem:[%s5 + $0xe0] sm:$0xf]
    %v1527 = vld [vmem:[%s5 + $0xe4] sm:$0xf]
    %v1528 = vld [vmem:[%s5 + $0xe8] sm:$0xf]
    %v1529 = vld [vmem:[%s5 + $0xec] sm:$0xf]
    %v1530 = vld [vmem:[%s5 + $0xf0] sm:$0xf]
    %v1531 = vld [vmem:[%s5 + $0xf4] sm:$0xf]
    %v1532 = vld [vmem:[%s5 + $0xf8] sm:$0xf]
    %v1533 = vld [vmem:[%s5 + $0xfc] sm:$0xf]
    %v1534 = vld [vmem:[%s6] sm:$0x1]
    %v1536 = vperm.slane %v1534, 0
    %v1602 = vunpack.c.l.b16 %v1470
    %v1603 = vunpack.c.l.b16 %v1471
    %v1604 = vunpack.c.l.b16 %v1472
    %v1605 = vunpack.c.l.b16 %v1473
    %v1606 = vunpack.c.l.b16 %v1474
    %v1607 = vunpack.c.l.b16 %v1475
    %v1608 = vunpack.c.l.b16 %v1476
    %v1609 = vunpack.c.l.b16 %v1477
    %v1610 = vunpack.c.l.b16 %v1478
    %v1611 = vunpack.c.l.b16 %v1479
    %v1612 = vunpack.c.l.b16 %v1480
    %v1613 = vunpack.c.l.b16 %v1481
    %v1614 = vunpack.c.l.b16 %v1482
    %v1615 = vunpack.c.l.b16 %v1483
    %v1616 = vunpack.c.l.b16 %v1484
    %v1617 = vunpack.c.l.b16 %v1485
    %v1618 = vunpack.c.l.b16 %v1486
    %v1619 = vunpack.c.l.b16 %v1487
    %v1620 = vunpack.c.l.b16 %v1488
    %v1621 = vunpack.c.l.b16 %v1489
    %v1622 = vunpack.c.l.b16 %v1490
    %v1623 = vunpack.c.l.b16 %v1491
    %v1624 = vunpack.c.l.b16 %v1492
    %v1625 = vunpack.c.l.b16 %v1493
    %v1626 = vunpack.c.l.b16 %v1494
    %v1627 = vunpack.c.l.b16 %v1495
    %v1628 = vunpack.c.l.b16 %v1496
    %v1629 = vunpack.c.l.b16 %v1497
    %v1630 = vunpack.c.l.b16 %v1498
    %v1631 = vunpack.c.l.b16 %v1499
    %v1632 = vunpack.c.l.b16 %v1500
    %v1633 = vunpack.c.l.b16 %v1501
    %v1634 = vunpack.c.l.b16 %v1502
    %v1635 = vunpack.c.l.b16 %v1503
    %v1636 = vunpack.c.l.b16 %v1504
    %v1637 = vunpack.c.l.b16 %v1505
    %v1638 = vunpack.c.l.b16 %v1506
    %v1639 = vunpack.c.l.b16 %v1507
    %v1640 = vunpack.c.l.b16 %v1508
    %v1641 = vunpack.c.l.b16 %v1509
    %v1642 = vunpack.c.l.b16 %v1510
    %v1643 = vunpack.c.l.b16 %v1511
    %v1644 = vunpack.c.l.b16 %v1512
    %v1645 = vunpack.c.l.b16 %v1513
    %v1646 = vunpack.c.l.b16 %v1514
    %v1647 = vunpack.c.l.b16 %v1515
    %v1648 = vunpack.c.l.b16 %v1516
    %v1649 = vunpack.c.l.b16 %v1517
    %v1650 = vunpack.c.l.b16 %v1518
    %v1651 = vunpack.c.l.b16 %v1519
    %v1652 = vunpack.c.l.b16 %v1520
    %v1653 = vunpack.c.l.b16 %v1521
    %v1654 = vunpack.c.l.b16 %v1522
    %v1655 = vunpack.c.l.b16 %v1523
    %v1656 = vunpack.c.l.b16 %v1524
    %v1657 = vunpack.c.l.b16 %v1525
    %v1658 = vunpack.c.l.b16 %v1526
    %v1659 = vunpack.c.l.b16 %v1527
    %v1660 = vunpack.c.l.b16 %v1528
    %v1661 = vunpack.c.l.b16 %v1529
    %v1662 = vunpack.c.l.b16 %v1530
    %v1663 = vunpack.c.l.b16 %v1531
    %v1664 = vunpack.c.l.b16 %v1532
    %v1665 = vunpack.c.l.b16 %v1533
    %v1666 = vpack.c.b16 %v1603, %v1602
    %v1667 = vpack.c.b16 %v1605, %v1604
    %v1668 = vpack.c.b16 %v1607, %v1606
    %v1669 = vpack.c.b16 %v1609, %v1608
    %v1670 = vpack.c.b16 %v1611, %v1610
    %v1671 = vpack.c.b16 %v1613, %v1612
    %v1672 = vpack.c.b16 %v1615, %v1614
    %v1673 = vpack.c.b16 %v1617, %v1616
    %v1674 = vpack.c.b16 %v1619, %v1618
    %v1675 = vpack.c.b16 %v1621, %v1620
    %v1676 = vpack.c.b16 %v1623, %v1622
    %v1677 = vpack.c.b16 %v1625, %v1624
    %v1678 = vpack.c.b16 %v1627, %v1626
    %v1679 = vpack.c.b16 %v1629, %v1628
    %v1680 = vpack.c.b16 %v1631, %v1630
    %v1681 = vpack.c.b16 %v1633, %v1632
    %v1682 = vpack.c.b16 %v1635, %v1634
    %v1683 = vpack.c.b16 %v1637, %v1636
    %v1684 = vpack.c.b16 %v1639, %v1638
    %v1685 = vpack.c.b16 %v1641, %v1640
    %v1686 = vpack.c.b16 %v1643, %v1642
    %v1687 = vpack.c.b16 %v1645, %v1644
    %v1688 = vpack.c.b16 %v1647, %v1646
    %v1689 = vpack.c.b16 %v1649, %v1648
    %v1690 = vpack.c.b16 %v1651, %v1650
    %v1691 = vpack.c.b16 %v1653, %v1652
    %v1692 = vpack.c.b16 %v1655, %v1654
    %v1693 = vpack.c.b16 %v1657, %v1656
    %v1694 = vpack.c.b16 %v1659, %v1658
    %v1695 = vpack.c.b16 %v1661, %v1660
    %v1696 = vpack.c.b16 %v1663, %v1662
    %v1697 = vpack.c.b16 %v1665, %v1664
    %1730 = vmatpush.bf16.msra.mxu0 %v1673
    %1731 = vmatpush.bf16.msra.mxu0 %v1672
    %1732 = vmatpush.bf16.msra.mxu0 %v1671
    %1733 = vmatpush.bf16.msra.mxu0 %v1670
    %1734 = vmatpush.bf16.msra.mxu0 %v1669
    %1735 = vmatpush.bf16.msra.mxu0 %v1668
    %1736 = vmatpush.bf16.msra.mxu0 %v1667
    %1737 = vmatpush.bf16.msra.mxu0 %v1666
    %1738 = vmatmul.bf16.gmra.mxu0 %v1466
    %v1739 = vpop.f32.mrf.mxu0
    %v1740 = vadd.f32 %v1536, %v1739
    %v1741 = vpop.f32.mrf.mxu0
    %1742 = vdwg.mxu0
    %1743 = vmatpush.bf16.msra.mxu0 %v1681
    %1744 = vmatpush.bf16.msra.mxu0 %v1680
    %1745 = vmatpush.bf16.msra.mxu0 %v1679
    %1746 = vmatpush.bf16.msra.mxu0 %v1678
    %1747 = vmatpush.bf16.msra.mxu0 %v1677
    %1748 = vmatpush.bf16.msra.mxu0 %v1676
    %1749 = vmatpush.bf16.msra.mxu0 %v1675
    %1750 = vmatpush.bf16.msra.mxu0 %v1674
    %1751 = vmatmul.bf16.gmra.mxu0 %v1467
    %v1752 = vpop.f32.mrf.mxu0
    %v1753 = vadd.f32 %v1740, %v1752
    %v1754 = vpop.f32.mrf.mxu0
    %1755 = vdwg.mxu0
    %1756 = vmatpush.bf16.msra.mxu0 %v1689
    %1757 = vmatpush.bf16.msra.mxu0 %v1688
    %1758 = vmatpush.bf16.msra.mxu0 %v1687
    %1759 = vmatpush.bf16.msra.mxu0 %v1686
    %1760 = vmatpush.bf16.msra.mxu0 %v1685
    %1761 = vmatpush.bf16.msra.mxu0 %v1684
    %1762 = vmatpush.bf16.msra.mxu0 %v1683
    %1763 = vmatpush.bf16.msra.mxu0 %v1682
    %1764 = vmatmul.bf16.gmra.mxu0 %v1468
    %v1765 = vpop.f32.mrf.mxu0
    %v1766 = vadd.f32 %v1753, %v1765
    %v1767 = vpop.f32.mrf.mxu0
    %1768 = vdwg.mxu0
    %1769 = vmatpush.bf16.msra.mxu0 %v1697
    %1770 = vmatpush.bf16.msra.mxu0 %v1696
    %1771 = vmatpush.bf16.msra.mxu0 %v1695
    %1772 = vmatpush.bf16.msra.mxu0 %v1694
    %1773 = vmatpush.bf16.msra.mxu0 %v1693
    %1774 = vmatpush.bf16.msra.mxu0 %v1692
    %1775 = vmatpush.bf16.msra.mxu0 %v1691
    %1776 = vmatpush.bf16.msra.mxu0 %v1690
    %1777 = vmatmul.bf16.gmra.mxu0 %v1469
    %v1778 = vpop.f32.mrf.mxu0
    %v1779 = vadd.f32 %v1766, %v1778
    %v1780 = vpop.f32.mrf.mxu0
    %1781 = vdwg.mxu0
    %vm1782 = vcmask 130048
    %1783 = vst.msk [vmem:[%s7] sm:$0xff] %vm1782, %v1779
    // Predicated region
    $region34: #{forward.1} parent=1 // pred_check
      _
    $region35: #{forward.1} parent=1 // pred_check_branch
      %1785 = sbr.rel (0) target = $region37
    $region36: #{forward.1} parent=1 // pred_region
      _
    $region37: #{forward.1} parent=1 // pred_fallthru
      _
    // Predicated region
    $region38: #{forward.1} parent=1 // pred_check
      _
    $region39: #{forward.1} parent=1 // pred_check_branch
      %1787 = sbr.rel (0) target = $region41
    $region40: #{forward.1} parent=1 // pred_region
      _
    $region41: #{forward.1} parent=1 // pred_fallthru
      _
    %1788 = vsyncpa [#allocation3], 1

</llo_original>
